<compile_context>
chip_gen: v7x
topology: tpu7x:2x2x1
jax: 0.10.0
libtpu: 0.0.40
codegen_flags: <defaults>
</compile_context>

<pallas_src>
import jax
import jax.numpy as jnp
from jax import lax
from jax.experimental import pallas as pl
from jax.experimental.pallas import tpu as pltpu


# ------------------------------ tiling helpers ------------------------------

def _vmem_capacity_bytes():
    """Physical per-core VMEM; conservative (v7x) default if the query fails."""
    try:
        info = pltpu.get_tpu_info()
        cap = getattr(info, "vmem_capacity_bytes", None)
        if cap:
            return int(cap)
    except Exception:
        pass
    return 64 << 20


def _gen_budgets():
    """Generation-aware tiling knobs (v5e/v6e: 128 MiB VMEM, v7x: 64 MiB)."""
    cap = _vmem_capacity_bytes()
    if cap >= (100 << 20):      # v5e / v6e: plenty of VMEM -> bigger tiles
        return dict(max_block_bytes=20 << 20, max_lanes=8192, vmem_budget=96 << 20)
    # v7x: 64 MiB physical VMEM per TensorCore -> conservative caps
    return dict(max_block_bytes=8 << 20, max_lanes=2048, vmem_budget=48 << 20)


def _pick_n_tile(n, c, itemsize, max_block_bytes):
    """Batch tile dividing N with >= 2 grid steps whenever N >= 2 (so the
    'parallel' axis actually feeds both v7x TensorCores), clamped so even the
    minimum 128-lane block stays under the per-block byte cap."""
    if n <= 1:
        return max(n, 1)
    cap = max(1, min(8, n // 2))                                   # >= 2 steps
    byte_cap = max(1, max_block_bytes // max(1, c * 128 * itemsize))
    cap = max(1, min(cap, byte_cap))
    for nt in range(cap, 0, -1):
        if n % nt == 0:
            return nt
    return 1


def _pick_hw_tile(hw_pad, n_tile, c, itemsize, max_block_bytes, max_lanes):
    """Largest multiple of 128 dividing hw_pad under the block-byte / lane caps
    (prefers long contiguous DMA rows; hw_pad is always a multiple of 128)."""
    cap = max_block_bytes // max(1, n_tile * c * itemsize)
    cap = int(min(max(128, cap), hw_pad, max_lanes))
    best, t = 128, 128
    while t <= cap:
        if hw_pad % t == 0:
            best = t
        t += 128
    return best


def _pick_c_chunk(c):
    """Sublane sub-chunk so per-row partial accumulators stay in a few vregs."""
    for cand in (64, 32, 16, 8):
        if c % cand == 0:
            return cand
    return c


# --------------------------------- kernel -----------------------------------

def _make_kernel(*, nt, c, c_chunk, hwt, n_slices, inv_hw, needs_mask, hw_total):
    """Kernel factory: all tile geometry and 1/(H*W) are baked in statically."""
    unroll = int(min(n_slices, 8))

    def kernel(x_ref, w1_ref, w2_ref, o_ref, psum, pmax):
        # x_ref:  (Nt, C, HWt)   input dtype (f32 / bf16)
        # w1_ref: (C, Cr) f32    (fc1 weight, transposed)
        # w2_ref: (Cr, C) f32    (fc2 weight, transposed)
        # o_ref:  (Nt, 1, C)     output dtype == input dtype
        # psum:   (Nt, C, 128) f32        128-lane-wide running partial sums
        # pmax:   (Nt, C, 128) x.dtype    128-lane-wide running partial maxes
        hw_idx = pl.program_id(1)

        @pl.when(hw_idx == 0)
        def _init():
            psum[...] = jnp.zeros_like(psum)
            pmax[...] = jnp.full_like(pmax, -jnp.inf)

        base = hw_idx * hwt                              # global lane offset
        neg_inf = jnp.array(-jnp.inf, dtype=pmax.dtype)

        # Streaming accumulation: per (batch row, C-chunk), carry the 128-lane
        # partial sum / max through a fori_loop so they stay in vregs.  All hot
        # ops are elementwise VPU add/max; no cross-lane reduce in this loop.
        for n in range(nt):                              # static, small
            for cc in range(0, c, c_chunk):              # static, small
                def body(i, carry, _n=n, _cc=cc):
                    s, m = carry
                    off = pl.multiple_of(i * 128, 128)
                    xb = x_ref[_n, _cc:_cc + c_chunk, pl.ds(off, 128)]
                    if needs_mask:
                        # Pad lanes (zero-filled in the wrapper) only corrupt
                        # the max, so mask just the max path.
                        lane = lax.broadcasted_iota(jnp.int32, (c_chunk, 128), 1)
                        xm = jnp.where(base + off + lane < hw_total, xb, neg_inf)
                    else:
                        xm = xb
                    return s + xb.astype(jnp.float32), jnp.maximum(m, xm)

                s0 = psum[n, cc:cc + c_chunk, :]
                m0 = pmax[n, cc:cc + c_chunk, :]
                s, m = lax.fori_loop(0, n_slices, body, (s0, m0), unroll=unroll)
                psum[n, cc:cc + c_chunk, :] = s
                pmax[n, cc:cc + c_chunk, :] = m

        @pl.when(hw_idx == pl.num_programs(1) - 1)
        def _finalize():
            # Single cross-lane (XLU) reduce per output element, once per tile.
            avg = jnp.sum(psum[...], axis=-1) * jnp.float32(inv_hw)      # (nt, c)
            mx = jnp.max(pmax[...], axis=-1).astype(jnp.float32)         # (nt, c)
            # Fused MLP: stack avg/max along sublanes -> single matmul chain.
            pooled = jnp.concatenate([avg, mx], axis=0)                  # (2nt, c)
            h = jnp.maximum(
                jnp.dot(pooled, w1_ref[...], preferred_element_type=jnp.float32),
                0.0)                                                     # ReLU
            y = jnp.dot(h, w2_ref[...], preferred_element_type=jnp.float32)
            out = jax.nn.sigmoid(y[:nt, :] + y[nt:, :])                  # (nt, c)
            o_ref[:, 0, :] = out.astype(o_ref.dtype)

    return kernel


# -------------------------------- wrapper ------------------------------------

@jax.jit
def channel_attention(x_nchw, w1, w2):
    """x_nchw: (N, C, H, W); w1: conv weight (Cr, C, 1, 1); w2: (C, Cr, 1, 1)."""
    N, C, H, W = x_nchw.shape
    Cr = w1.shape[0]
    HW = H * W
    dtype = x_nchw.dtype
    itemsize = jnp.dtype(dtype).itemsize

    budgets = _gen_budgets()

    # Keep x in its native dtype (no wrapper-side upcast -> no extra HBM pass).
    x3 = x_nchw.reshape(N, C, HW)
    needs_mask = (HW % 128) != 0
    if needs_mask:
        # Odd spatial sizes: zero-pad the lane axis up to a multiple of 128;
        # the kernel masks the padded lanes out of the max path.
        hw_pad = ((HW + 127) // 128) * 128
        x3 = jnp.pad(x3, ((0, 0), (0, 0), (0, hw_pad - HW)))
    else:
        hw_pad = HW

    # Tiny weights: keep in f32 for accumulation precision.
    w1t = w1.reshape(Cr, C).T.astype(jnp.float32)     # (C, Cr)
    w2t = w2.reshape(C, Cr).T.astype(jnp.float32)     # (Cr, C)

    Nt = _pick_n_tile(N, C, itemsize, budgets["max_block_bytes"])
    HWt = _pick_hw_tile(hw_pad, Nt, C, itemsize,
                        budgets["max_block_bytes"], budgets["max_lanes"])
    n_slices = HWt // 128
    c_chunk = _pick_c_chunk(C)

    grid = (N // Nt, hw_pad // HWt)

    x_block_bytes = Nt * C * HWt * itemsize
    scratch_bytes = Nt * C * 128 * (4 + itemsize)
    needed = 3 * x_block_bytes + scratch_bytes + (2 << 20)
    vmem_limit = int(min(budgets["vmem_budget"], max(needed, 32 << 20)))

    kernel = _make_kernel(nt=Nt, c=C, c_chunk=c_chunk, hwt=HWt,
                          n_slices=n_slices, inv_hw=1.0 / float(HW),
                          needs_mask=needs_mask, hw_total=HW)

    out = pl.pallas_call(
        kernel,
        out_shape=jax.ShapeDtypeStruct((N, 1, C), dtype),
        grid_spec=pltpu.PrefetchScalarGridSpec(
            num_scalar_prefetch=0,
            grid=grid,
            in_specs=[
                pl.BlockSpec((Nt, C, HWt), lambda n, k: (n, 0, k)),
                pl.BlockSpec((C, Cr), lambda n, k: (0, 0)),
                pl.BlockSpec((Cr, C), lambda n, k: (0, 0)),
            ],
            out_specs=pl.BlockSpec((Nt, 1, C), lambda n, k: (n, 0, 0)),
            scratch_shapes=[
                pltpu.VMEM((Nt, C, 128), jnp.float32),   # 128-lane partial sums
                pltpu.VMEM((Nt, C, 128), dtype),         # 128-lane partial maxes
            ],
        ),
        compiler_params=pltpu.CompilerParams(
            dimension_semantics=("parallel", "arbitrary"),
            vmem_limit_bytes=vmem_limit,
        ),
    )(x3, w1t, w2t)

    return out.reshape(N, C, 1, 1)


# ------------------------------- reference -----------------------------------

def channel_attention_ref(x_nchw, w1, w2):
    """Pure-JAX reference replicating the PyTorch forward."""
    N, C, H, W = x_nchw.shape
    Cr = w1.shape[0]
    w1m = w1.reshape(Cr, C)
    w2m = w2.reshape(C, Cr)
    avg = jnp.mean(x_nchw.astype(jnp.float32), axis=(2, 3))   # (N, C)
    mx = jnp.max(x_nchw.astype(jnp.float32), axis=(2, 3))     # (N, C)

    def mlp(v):
        h = jnp.maximum(v @ w1m.T, 0.0)
        return h @ w2m.T

    out = jax.nn.sigmoid(mlp(avg) + mlp(mx))
    return out.reshape(N, C, 1, 1).astype(x_nchw.dtype)


if __name__ == "__main__":
    # Small shapes consistent with the module: in_channels=64, reduction_ratio=16.
    N, C, H, W = 2, 64, 16, 16
    reduction_ratio = 16
    Cr = C // reduction_ratio  # = 4

    key = jax.random.PRNGKey(0)
    kx, k1, k2, kx2 = jax.random.split(key, 4)

    x = jax.random.normal(kx, (N, C, H, W), dtype=jnp.float32)
    # Deterministic synthetic weights (Conv2d-like fan-in scaling, no bias).
    w1 = jax.random.normal(k1, (Cr, C, 1, 1), dtype=jnp.float32) * (1.0 / jnp.sqrt(C))
    w2 = jax.random.normal(k2, (C, Cr, 1, 1), dtype=jnp.float32) * (1.0 / jnp.sqrt(Cr))

    # Main (128-aligned HW) path.
    out = jax.block_until_ready(channel_attention(x, w1, w2))
    ref = channel_attention_ref(x, w1, w2)
    assert out.shape == (N, C, 1, 1)
    assert jnp.allclose(out, ref, atol=1e-5, rtol=1e-5), "mismatch vs reference"

    # Odd-spatial (masked / padded) path: H = W = 15 -> HW = 225.
    x_odd = jax.random.normal(kx2, (N, C, 15, 15), dtype=jnp.float32)
    out_odd = jax.block_until_ready(channel_attention(x_odd, w1, w2))
    ref_odd = channel_attention_ref(x_odd, w1, w2)
    assert jnp.allclose(out_odd, ref_odd, atol=1e-5, rtol=1e-5), "odd-HW mismatch"

    print("KERNEL_OK")
</pallas_src>

<mosaic_0001>
module attributes {stable_mosaic.version = 11 : i64} {
  func.func @kernel(%arg0: i32, %arg1: i32, %arg2: memref<1x64x256xf32, #tpu.memory_space<vmem>>, %arg3: memref<64x4xf32, #tpu.memory_space<vmem>>, %arg4: memref<4x64xf32, #tpu.memory_space<vmem>>, %arg5: memref<1x1x64xf32, #tpu.memory_space<vmem>>, %arg6: memref<1x64x128xf32, #tpu.memory_space<vmem>>, %arg7: memref<1x64x128xf32, #tpu.memory_space<vmem>>) attributes {dimension_semantics = [#tpu.dimension_semantics<parallel>, #tpu.dimension_semantics<arbitrary>], iteration_bounds = array<i64: 2, 1>, scalar_prefetch = 0 : i64, scratch_operands = 2 : i64, tpu.core_type = #tpu.core_type<tc>, window_params = [{transform_indices = @transform_0, window_bounds = array<i64: 1, 64, 256>}, {pipeline_mode = #tpu.pipeline_mode<synchronous>, transform_indices = @transform_1, window_bounds = array<i64: 64, 4>}, {pipeline_mode = #tpu.pipeline_mode<synchronous>, transform_indices = @transform_2, window_bounds = array<i64: 4, 64>}, {transform_indices = @transform_3, window_bounds = array<i64: 1, 1, 64>}]} {
    %c0_i32 = arith.constant 0 : i32
    %0 = arith.cmpi eq, %arg1, %c0_i32 : i32
    %1 = arith.extui %0 : i1 to i32
    %c0_i32_0 = arith.constant 0 : i32
    %2 = arith.cmpi ne, %1, %c0_i32_0 : i32
    scf.if %2 {
      %cst = arith.constant 0.000000e+00 : f32
      %30 = vector.broadcast %cst : f32 to vector<1x64x128xf32>
      %c0_20 = arith.constant 0 : index
      %c0_21 = arith.constant 0 : index
      %c0_22 = arith.constant 0 : index
      %31 = vector.load %arg6[%c0_20, %c0_21, %c0_22] : memref<1x64x128xf32, #tpu.memory_space<vmem>>, vector<1x64x128xf32>
      tpu.vector_store %arg6[%c0_20, %c0_21, %c0_22], %30 {strides = array<i32>} : memref<1x64x128xf32, #tpu.memory_space<vmem>>, vector<1x64x128xf32>,
      %cst_23 = arith.constant 0xFF800000 : f32
      %32 = vector.broadcast %cst_23 : f32 to vector<1x64x128xf32>
      %c0_24 = arith.constant 0 : index
      %c0_25 = arith.constant 0 : index
      %c0_26 = arith.constant 0 : index
      %33 = vector.load %arg7[%c0_24, %c0_25, %c0_26] : memref<1x64x128xf32, #tpu.memory_space<vmem>>, vector<1x64x128xf32>
      tpu.vector_store %arg7[%c0_24, %c0_25, %c0_26], %32 {strides = array<i32>} : memref<1x64x128xf32, #tpu.memory_space<vmem>>, vector<1x64x128xf32>,
    } else {
    }
    %c0 = arith.constant 0 : index
    %c0_1 = arith.constant 0 : index
    %c0_2 = arith.constant 0 : index
    %3 = vector.load %arg6[%c0, %c0_1, %c0_2] : memref<1x64x128xf32, #tpu.memory_space<vmem>>, vector<1x64x128xf32>
    %4 = vector.shape_cast %3 : vector<1x64x128xf32> to vector<64x128xf32>
    %c0_3 = arith.constant 0 : index
    %c0_4 = arith.constant 0 : index
    %c0_5 = arith.constant 0 : index
    %5 = vector.load %arg7[%c0_3, %c0_4, %c0_5] : memref<1x64x128xf32, #tpu.memory_space<vmem>>, vector<1x64x128xf32>
    %6 = vector.shape_cast %5 : vector<1x64x128xf32> to vector<64x128xf32>
    %c0_i32_6 = arith.constant 0 : i32
    %c128_i32 = arith.constant 128 : i32
    %7 = arith.muli %c0_i32_6, %c128_i32 : i32
    %8 = tpu.assume_multiple %7, 128 : i32
    %c0_7 = arith.constant 0 : index
    %c0_8 = arith.constant 0 : index
    %9 = arith.index_cast %8 : i32 to index
    %10 = vector.load %arg2[%c0_7, %c0_8, %9] : memref<1x64x256xf32, #tpu.memory_space<vmem>>, vector<1x64x128xf32>
    %11 = vector.shape_cast %10 : vector<1x64x128xf32> to vector<64x128xf32>
    %12 = arith.addf %4, %11 : vector<64x128xf32>
    %13 = arith.maximumf %6, %11 : vector<64x128xf32>
    %c1_i32 = arith.constant 1 : i32
    %c128_i32_9 = arith.constant 128 : i32
    %14 = arith.muli %c1_i32, %c128_i32_9 : i32
    %15 = tpu.assume_multiple %14, 128 : i32
    %c0_10 = arith.constant 0 : index
    %c0_11 = arith.constant 0 : index
    %16 = arith.index_cast %15 : i32 to index
    %17 = vector.load %arg2[%c0_10, %c0_11, %16] : memref<1x64x256xf32, #tpu.memory_space<vmem>>, vector<1x64x128xf32>
    %18 = vector.shape_cast %17 : vector<1x64x128xf32> to vector<64x128xf32>
    %19 = arith.addf %12, %18 : vector<64x128xf32>
    %20 = arith.maximumf %13, %18 : vector<64x128xf32>
    %c2_i32 = arith.constant 2 : i32
    %c0_12 = arith.constant 0 : index
    %c0_13 = arith.constant 0 : index
    %c0_14 = arith.constant 0 : index
    %21 = vector.load %arg6[%c0_12, %c0_13, %c0_14] : memref<1x64x128xf32, #tpu.memory_space<vmem>>, vector<1x64x128xf32>
    %22 = vector.shape_cast %21 : vector<1x64x128xf32> to vector<64x128xf32>
    %23 = vector.shape_cast %19 : vector<64x128xf32> to vector<1x64x128xf32>
    tpu.vector_store %arg6[%c0_12, %c0_13, %c0_14], %23 {strides = array<i32>} : memref<1x64x128xf32, #tpu.memory_space<vmem>>, vector<1x64x128xf32>,
    %c0_15 = arith.constant 0 : index
    %c0_16 = arith.constant 0 : index
    %c0_17 = arith.constant 0 : index
    %24 = vector.load %arg7[%c0_15, %c0_16, %c0_17] : memref<1x64x128xf32, #tpu.memory_space<vmem>>, vector<1x64x128xf32>
    %25 = vector.shape_cast %24 : vector<1x64x128xf32> to vector<64x128xf32>
    %26 = vector.shape_cast %20 : vector<64x128xf32> to vector<1x64x128xf32>
    tpu.vector_store %arg7[%c0_15, %c0_16, %c0_17], %26 {strides = array<i32>} : memref<1x64x128xf32, #tpu.memory_space<vmem>>, vector<1x64x128xf32>,
    %c0_i32_18 = arith.constant 0 : i32
    %27 = arith.cmpi eq, %arg1, %c0_i32_18 : i32
    %28 = arith.extui %27 : i1 to i32
    %c0_i32_19 = arith.constant 0 : i32
    %29 = arith.cmpi ne, %28, %c0_i32_19 : i32
    scf.if %29 {
      %c0_20 = arith.constant 0 : index
      %c0_21 = arith.constant 0 : index
      %c0_22 = arith.constant 0 : index
      %30 = vector.load %arg6[%c0_20, %c0_21, %c0_22] : memref<1x64x128xf32, #tpu.memory_space<vmem>>, vector<1x64x128xf32>
      %cst = arith.constant dense<0.000000e+00> : vector<1x64xf32>
      %31 = vector.multi_reduction <add>, %30, %cst [2] : vector<1x64x128xf32> to vector<1x64xf32>
      %cst_23 = arith.constant 3.906250e-03 : f32
      %32 = vector.broadcast %cst_23 : f32 to vector<1x64xf32>
      %33 = arith.mulf %31, %32 : vector<1x64xf32>
      %c0_24 = arith.constant 0 : index
      %c0_25 = arith.constant 0 : index
      %c0_26 = arith.constant 0 : index
      %34 = vector.load %arg7[%c0_24, %c0_25, %c0_26] : memref<1x64x128xf32, #tpu.memory_space<vmem>>, vector<1x64x128xf32>
      %cst_27 = arith.constant dense<0xFF800000> : vector<1x64xf32>
      %35 = vector.multi_reduction <maximumf>, %34, %cst_27 [2] : vector<1x64x128xf32> to vector<1x64xf32>
      %36 = tpu.concatenate %33, %35 in 0 : vector<1x64xf32>, vector<1x64xf32> -> vector<2x64xf32>
      %c0_28 = arith.constant 0 : index
      %c0_29 = arith.constant 0 : index
      %37 = vector.load %arg3[%c0_28, %c0_29] : memref<64x4xf32, #tpu.memory_space<vmem>>, vector<64x4xf32>
      %cst_30 = arith.constant dense<0.000000e+00> : vector<2x4xf32>
      %38 = tpu.matmul %36, %37, %cst_30 {dimension_numbers = #tpu.dot_dimension_numbers<[1], [0], [0], [1], [0, 0, 1, 1], [], []>} : vector<2x64xf32>, vector<64x4xf32>, vector<2x4xf32> -> vector<2x4xf32>
      %cst_31 = arith.constant 0.000000e+00 : f32
      %39 = vector.broadcast %cst_31 : f32 to vector<2x4xf32>
      %40 = arith.maximumf %38, %39 : vector<2x4xf32>
      %c0_32 = arith.constant 0 : index
      %c0_33 = arith.constant 0 : index
      %41 = vector.load %arg4[%c0_32, %c0_33] : memref<4x64xf32, #tpu.memory_space<vmem>>, vector<4x64xf32>
      %cst_34 = arith.constant dense<0.000000e+00> : vector<2x64xf32>
      %42 = tpu.matmul %40, %41, %cst_34 {dimension_numbers = #tpu.dot_dimension_numbers<[1], [0], [0], [1], [0, 0, 1, 1], [], []>} : vector<2x4xf32>, vector<4x64xf32>, vector<2x64xf32> -> vector<2x64xf32>
      %43 = vector.extract_strided_slice %42 {offsets = [0, 0], sizes = [1, 64], strides = [1, 1]} : vector<2x64xf32> to vector<1x64xf32>
      %44 = vector.extract_strided_slice %42 {offsets = [1, 0], sizes = [1, 64], strides = [1, 1]} : vector<2x64xf32> to vector<1x64xf32>
      %45 = arith.addf %43, %44 : vector<1x64xf32>
      %46 = arith.negf %45 : vector<1x64xf32>
      %47 = math.exp %46 : vector<1x64xf32>
      %cst_35 = arith.constant 1.000000e+00 : f32
      %48 = vector.broadcast %cst_35 : f32 to vector<1x64xf32>
      %49 = arith.addf %48, %47 : vector<1x64xf32>
      %50 = arith.divf %48, %49 : vector<1x64xf32>
      %c0_36 = arith.constant 0 : index
      %c0_37 = arith.constant 0 : index
      %c0_38 = arith.constant 0 : index
      %51 = vector.load %arg5[%c0_36, %c0_37, %c0_38] : memref<1x1x64xf32, #tpu.memory_space<vmem>>, vector<1x1x64xf32>
      %52 = vector.shape_cast %51 : vector<1x1x64xf32> to vector<1x64xf32>
      %53 = vector.shape_cast %50 : vector<1x64xf32> to vector<1x1x64xf32>
      tpu.vector_store %arg5[%c0_36, %c0_37, %c0_38], %53 {strides = array<i32>} : memref<1x1x64xf32, #tpu.memory_space<vmem>>, vector<1x1x64xf32>,
    } else {
    }
    return
  }
  func.func @transform_0(%arg0: i32, %arg1: i32) -> (i32, i32, i32) {
    %c0_i32 = arith.constant 0 : i32
    %c0_i32_0 = arith.constant 0 : i32
    return %arg0, %c0_i32, %arg1 : i32, i32, i32
  }
  func.func @transform_1(%arg0: i32, %arg1: i32) -> (i32, i32) {
    %c0_i32 = arith.constant 0 : i32
    %c0_i32_0 = arith.constant 0 : i32
    %c0_i32_1 = arith.constant 0 : i32
    return %c0_i32, %c0_i32_0 : i32, i32
  }
  func.func @transform_2(%arg0: i32, %arg1: i32) -> (i32, i32) {
    %c0_i32 = arith.constant 0 : i32
    %c0_i32_0 = arith.constant 0 : i32
    %c0_i32_1 = arith.constant 0 : i32
    return %c0_i32, %c0_i32_0 : i32, i32
  }
  func.func @transform_3(%arg0: i32, %arg1: i32) -> (i32, i32, i32) {
    %c0_i32 = arith.constant 0 : i32
    %c0_i32_0 = arith.constant 0 : i32
    %c0_i32_1 = arith.constant 0 : i32
    return %arg0, %c0_i32, %c0_i32_0 : i32, i32, i32
  }
}

</mosaic_0001>

<llo_original>
// kernel: channel_attention.1
$region0: #{channel_attention.1}
  #allocation0 [shape = 'u32[]', space=smem, size = 0x4, offset = 0x4, fixed_abs, tag = 'smem constant byte address 0x4 - core index']
  #allocation1 [shape = 'u32[144,128]{1,0:T(1,128)}', space=vmem, size = 0x12000, scoped, tag = 'internal scratch']
  #allocation2 [shape = 'f32[1,64,128]{2,1,0:T(8,128)}', space=vmem, size = 0x8000, scoped, tag = 'scratch operand']
  #allocation3 [shape = 'f32[1,64,128]{2,1,0:T(8,128)}', space=vmem, size = 0x8000, scoped, tag = 'scratch operand']
  %s0 = inlined_call_operand.vmem [shape: f32[2,64,256], index: 0, kind: input, shape index: {}]
  %s1 = inlined_call_operand.vmem [shape: f32[64,4], index: 1, kind: input, shape index: {}]
  %s2 = inlined_call_operand.vmem [shape: f32[4,64], index: 2, kind: input, shape index: {}]
  %s3 = inlined_call_operand.hbm [shape: f32[2,1,64], index: 3, kind: output, shape index: {}]
  %s4 = sld [smem:[#allocation0]]
  $region53: #{channel_attention.1} parent=0
    _
  %s6 = ssub.s32 1, %s4
  %s7 = scalar_select 0, %s6, %s4
  $region1: #{channel_attention.1} parent=0
    #allocation4 [shape = 'u8[1024]{0}', space=vmem, size = 0x400, scoped, tag = 'output window, operand 0']
    #allocation5 [shape = 's32[2]{0}', space=sflag, size = 0x8, scoped, tag = 'scoped memory for channel_attention.1']
    %8 = vsyncpa [#allocation5], 0
    %s9 = scalar_lea.sflag [#allocation5], 1
    %10 = vsyncpa %s9, 0
    loop: start=0, step=1, limit=4
    $region2: #{channel_attention.1} parent=1 // loop_pre_header
      _
    $region3: #{channel_attention.1} parent=1 // loop_header
      %s12 = sphi 0, %s16
      %p13 = scmp.ge.s32.totalorder %s12, 4
      %s19 = sphi 0, %s31
      %s20 = sphi 0, %s27
      %s21 = sphi 0, %s19
      %s22 = sphi 0, %s20
      %s23 = sphi 0, %s21
      %s24 = sphi 0, %s22
      %s36 = sphi 0, %s38
      %s39 = sphi 0, %s36
      %s40 = sphi 0, %s39
      %s56 = sphi 0, %s40
      %s60 = sphi 0, %s60
      %s62 = sphi 0, %s60
      %s63 = sphi 0, %s62
      %s77 = sphi 0, %s63
      %s81 = sphi 0, %s81
      %s83 = sphi 0, %s81
      %s84 = sphi 0, %s83
      %s98 = sphi 0, %s84
      %s104 = sphi 0, %s106
      %s107 = sphi 0, %s104
      %s108 = sphi 0, %s107
      %s124 = sphi 0, %s108
    $region4: #{channel_attention.1} parent=1 // loop_header_branch
      %15 = sbr.rel (%p13) target = $region8
    $region5: #{channel_attention.1} parent=1 // loop_body
      %s17 = ssub.s32 %s12, 1
      %s18 = ssub.s32 %s12, 2
      %s25 = sadd.s32 1, %s20
      %p26 = scmp.ge.s32.totalorder %s25, 1
      %s27 = scalar_select %p26, 0, %s25
      %s28 = sadd.s32 1, %s19
      %s29 = scalar_select %p26, %s28, %s19
      %p30 = scmp.ge.s32.totalorder %s29, 2
      %s31 = scalar_select %p30, 0, %s29
      %s32 = ssub.s32 %s19, %s31
      %s33 = ssub.s32 %s20, %s27
      %s34 = sor.u32 %s32, %s33
      %p35 = scmp.eq.s32.totalorder %s34, 0
      %s37 = sadd.s32 %s36, 1
      %s38 = scalar_select %p35, %s36, %s37
      %p41 = pneg %p35
      %p42 = scmp.eq.s32.totalorder %s12, 1
      %p43 = por %p41, %p42
      %p44 = scmp.ne.s32.totalorder %s36, %s39
      %p45 = scmp.eq.s32.totalorder %s12, 0
      %p46 = por %p44, %p45
      %p47 = scmp.ne.s32.totalorder %s36, %s39
      %p48 = scmp.eq.s32.totalorder %s17, 1
      %p49 = por %p47, %p48
      %p50 = scmp.ne.s32.totalorder %s39, %s40
      %p51 = scmp.eq.s32.totalorder %s17, 0
      %p52 = por %p50, %p51
      %p53 = scmp.ne.s32.totalorder %s39, %s40
      %p54 = scmp.eq.s32.totalorder %s18, 1
      %p55 = por %p53, %p54
      %p57 = scmp.ne.s32.totalorder %s40, %s56
      %p58 = scmp.eq.s32.totalorder %s18, 0
      %p59 = por %p57, %p58
      %s61 = sadd.s32 %s60, 1
      %p64 = scmp.eq.s32.totalorder %s12, 1
      %p65 = scmp.ne.s32.totalorder %s60, %s62
      %p66 = scmp.eq.s32.totalorder %s12, 0
      %p67 = por %p65, %p66
      %p68 = scmp.ne.s32.totalorder %s60, %s62
      %p69 = scmp.eq.s32.totalorder %s17, 1
      %p70 = por %p68, %p69
      %p71 = scmp.ne.s32.totalorder %s62, %s63
      %p72 = scmp.eq.s32.totalorder %s17, 0
      %p73 = por %p71, %p72
      %p74 = scmp.ne.s32.totalorder %s62, %s63
      %p75 = scmp.eq.s32.totalorder %s18, 1
      %p76 = por %p74, %p75
      %p78 = scmp.ne.s32.totalorder %s63, %s77
      %p79 = scmp.eq.s32.totalorder %s18, 0
      %p80 = por %p78, %p79
      %s82 = sadd.s32 %s81, 1
      %p85 = scmp.eq.s32.totalorder %s12, 1
      %p86 = scmp.ne.s32.totalorder %s81, %s83
      %p87 = scmp.eq.s32.totalorder %s12, 0
      %p88 = por %p86, %p87
      %p89 = scmp.ne.s32.totalorder %s81, %s83
      %p90 = scmp.eq.s32.totalorder %s17, 1
      %p91 = por %p89, %p90
      %p92 = scmp.ne.s32.totalorder %s83, %s84
      %p93 = scmp.eq.s32.totalorder %s17, 0
      %p94 = por %p92, %p93
      %p95 = scmp.ne.s32.totalorder %s83, %s84
      %p96 = scmp.eq.s32.totalorder %s18, 1
      %p97 = por %p95, %p96
      %p99 = scmp.ne.s32.totalorder %s84, %s98
      %p100 = scmp.eq.s32.totalorder %s18, 0
      %p101 = por %p99, %p100
      %s102 = ssub.s32 %s19, %s31
      %p103 = scmp.eq.s32.totalorder %s102, 0
      %s105 = sadd.s32 %s104, 1
      %s106 = scalar_select %p103, %s104, %s105
      %p109 = pneg %p103
      %p110 = scmp.eq.s32.totalorder %s12, 1
      %p111 = por %p109, %p110
      %p112 = scmp.ne.s32.totalorder %s104, %s107
      %p113 = scmp.eq.s32.totalorder %s12, 0
      %p114 = por %p112, %p113
      %p115 = scmp.ne.s32.totalorder %s104, %s107
      %p116 = scmp.eq.s32.totalorder %s17, 1
      %p117 = por %p115, %p116
      %p118 = scmp.ne.s32.totalorder %s107, %s108
      %p119 = scmp.eq.s32.totalorder %s17, 0
      %p120 = por %p118, %p119
      %p121 = scmp.ne.s32.totalorder %s107, %s108
      %p122 = scmp.eq.s32.totalorder %s18, 1
      %p123 = por %p121, %p122
      %p125 = scmp.ne.s32.totalorder %s108, %s124
      %p126 = scmp.eq.s32.totalorder %s18, 0
      %p127 = por %p125, %p126
      %p128 = scmp.le.s32.totalorder 1, %s12
      %p129 = scmp.lt.s32.totalorder %s12, 3
      %p130 = pnand %p128, %p129
      %p131 = pneg %p130
      // Predicated region
      $region9: #{channel_attention.1} parent=5 // pred_check
        _
      $region10: #{channel_attention.1} parent=5 // pred_check_branch
        %133 = sbr.rel (%p130) target = $region12
      $region11: #{channel_attention.1} parent=5 // pred_region
        %s134 = ssub.s32 %s12, 1
        // Predicated region
        $region13: #{channel_attention.1} parent=11 // pred_check
          %p135 = pneg %p73
        $region14: #{channel_attention.1} parent=11 // pred_check_branch
          %137 = sbr.rel (%p135) target = $region16
        $region15: #{channel_attention.1} parent=11 // pred_region
          _
        $region16: #{channel_attention.1} parent=11 // pred_fallthru
          _
        // Predicated region
        $region17: #{channel_attention.1} parent=11 // pred_check
          %p138 = pneg %p94
        $region18: #{channel_attention.1} parent=11 // pred_check_branch
          %140 = sbr.rel (%p138) target = $region20
        $region19: #{channel_attention.1} parent=11 // pred_region
          _
        $region20: #{channel_attention.1} parent=11 // pred_fallthru
          _
      $region12: #{channel_attention.1} parent=5 // pred_fallthru
        _
      %p141 = scmp.lt.s32.totalorder %s12, 2
      // Predicated region
      $region21: #{channel_attention.1} parent=5 // pred_check
        %p142 = pneg %p141
      $region22: #{channel_attention.1} parent=5 // pred_check_branch
        %144 = sbr.rel (%p142) target = $region24
      $region23: #{channel_attention.1} parent=5 // pred_region
        // Predicated region
        $region25: #{channel_attention.1} parent=23 // pred_check
          %p145 = pneg %p46
        $region26: #{channel_attention.1} parent=23 // pred_check_branch
          %147 = sbr.rel (%p145) target = $region28
        $region27: #{channel_attention.1} parent=23 // pred_region
          %s148 = smul.u32 2, %s20
          %p149 = scmp.lt.s32.totalorder %s19, 1
          %s150 = scalar_select %p149, %s19, 1
          %p151 = scmp.lt.s32.totalorder %s148, 1
          %s152 = scalar_select %p151, %s148, 1
          %s153 = smul.addr %s150, 16
          %s154 = sadd.s32 %s152, %s153
          %s155 = smul.addr %s154, 8
          %s156 = scalar_lea.vmem %s0, %s155
          %s157 = smul.u32 2, %s20
        $region28: #{channel_attention.1} parent=23 // pred_fallthru
          _
      $region24: #{channel_attention.1} parent=5 // pred_fallthru
        _
      %p158 = scmp.le.s32.totalorder 1, %s12
      %p159 = scmp.lt.s32.totalorder %s12, 3
      %p160 = pnand %p158, %p159
      %p161 = pneg %p160
      // Predicated region
      $region29: #{channel_attention.1} parent=5 // pred_check
        _
      $region30: #{channel_attention.1} parent=5 // pred_check_branch
        %163 = sbr.rel (%p160) target = $region32
      $region31: #{channel_attention.1} parent=5 // pred_region
        %s164 = ssub.s32 %s12, 1
        %s165 = smul.u32 2, %s22
        %p166 = scmp.lt.s32.totalorder %s21, 1
        %s167 = scalar_select %p166, %s21, 1
        %p168 = scmp.lt.s32.totalorder %s165, 1
        %s169 = scalar_select %p168, %s165, 1
        %s170 = smul.addr %s167, 16
        %s171 = sadd.s32 %s169, %s170
        %s172 = smul.addr %s171, 8
        %s173 = scalar_lea.vmem %s0, %s172
        %p174 = pneg %p52
        %p175 = pneg %p49
        %p176 = pneg %p73
        %p177 = pneg %p70
        %p178 = pneg %p94
        %p179 = pneg %p91
        %p180 = pneg %p120
        %p181 = pneg %p117
        %s182 = sand.u32 %s107, 1
        %s183 = scalar_lea.sflag [#allocation5], %s182
        %s184 = sand.u32 %s107, 1
        %s185 = scalar_lea.vmem [#allocation4], %s184
        %s186 = smul.u32 2, %s22
        %p187 = scmp.lt.s32.totalorder %s21, 1
        %s188 = scalar_select %p187, %s21, 1
        %p189 = scmp.lt.s32.totalorder %s186, 1
        %s190 = scalar_select %p189, %s186, 1
        %s191 = smul.addr %s188, 16
        %s192 = sadd.s32 %s190, %s191
        %s193 = smul.addr %s192, 8
        %s194 = scalar_lea.vmem %s0, %s193
        %s195 = smul.u32 2, %s22
        %p196 = scmp.eq.s32.totalorder %s22, 0
        // Predicated region
        $region33: #{channel_attention.1} parent=31 // pred_check
          %p197 = pneg %p196
        $region34: #{channel_attention.1} parent=31 // pred_check_branch
          %199 = sbr.rel (%p197) target = $region36
        $region35: #{channel_attention.1} parent=31 // pred_region
          %200 = vst [vmem:[#allocation2] sm:$0xff] 0.0
          %201 = vst [vmem:[#allocation2 + $0x8] sm:$0xff] 0.0
          %202 = vst [vmem:[#allocation2 + $0x10] sm:$0xff] 0.0
          %203 = vst [vmem:[#allocation2 + $0x18] sm:$0xff] 0.0
          %204 = vst [vmem:[#allocation2 + $0x20] sm:$0xff] 0.0
          %205 = vst [vmem:[#allocation2 + $0x28] sm:$0xff] 0.0
          %206 = vst [vmem:[#allocation2 + $0x30] sm:$0xff] 0.0
          %207 = vst [vmem:[#allocation2 + $0x38] sm:$0xff] 0.0
          %208 = vst [vmem:[#allocation3] sm:$0xff] -inf
          %209 = vst [vmem:[#allocation3 + $0x8] sm:$0xff] -inf
          %210 = vst [vmem:[#allocation3 + $0x10] sm:$0xff] -inf
          %211 = vst [vmem:[#allocation3 + $0x18] sm:$0xff] -inf
          %212 = vst [vmem:[#allocation3 + $0x20] sm:$0xff] -inf
          %213 = vst [vmem:[#allocation3 + $0x28] sm:$0xff] -inf
          %214 = vst [vmem:[#allocation3 + $0x30] sm:$0xff] -inf
          %215 = vst [vmem:[#allocation3 + $0x38] sm:$0xff] -inf
        $region36: #{channel_attention.1} parent=31 // pred_fallthru
          _
        %v216 = vld [vmem:[#allocation2] sm:$0xff]
        %v217 = vld [vmem:[#allocation2 + $0x8] sm:$0xff]
        %v218 = vld [vmem:[#allocation2 + $0x10] sm:$0xff]
        %v219 = vld [vmem:[#allocation2 + $0x18] sm:$0xff]
        %v220 = vld [vmem:[#allocation2 + $0x20] sm:$0xff]
        %v221 = vld [vmem:[#allocation2 + $0x28] sm:$0xff]
        %v222 = vld [vmem:[#allocation2 + $0x30] sm:$0xff]
        %v223 = vld [vmem:[#allocation2 + $0x38] sm:$0xff]
        %v224 = vld [vmem:[#allocation3] sm:$0xff]
        %v225 = vld [vmem:[#allocation3 + $0x8] sm:$0xff]
        %v226 = vld [vmem:[#allocation3 + $0x10] sm:$0xff]
        %v227 = vld [vmem:[#allocation3 + $0x18] sm:$0xff]
        %v228 = vld [vmem:[#allocation3 + $0x20] sm:$0xff]
        %v229 = vld [vmem:[#allocation3 + $0x28] sm:$0xff]
        %v230 = vld [vmem:[#allocation3 + $0x30] sm:$0xff]
        %v231 = vld [vmem:[#allocation3 + $0x38] sm:$0xff]
        %v232 = vld [vmem:[%s194] sm:$0xff]
        %v233 = vld [vmem:[%s194 + $0x10] sm:$0xff]
        %v234 = vld [vmem:[%s194 + $0x20] sm:$0xff]
        %v235 = vld [vmem:[%s194 + $0x30] sm:$0xff]
        %v236 = vld [vmem:[%s194 + $0x40] sm:$0xff]
        %v237 = vld [vmem:[%s194 + $0x50] sm:$0xff]
        %v238 = vld [vmem:[%s194 + $0x60] sm:$0xff]
        %v239 = vld [vmem:[%s194 + $0x70] sm:$0xff]
        %v240 = vadd.f32 %v216, %v232
        %v241 = vadd.f32 %v217, %v233
        %v242 = vadd.f32 %v218, %v234
        %v243 = vadd.f32 %v219, %v235
        %v244 = vadd.f32 %v220, %v236
        %v245 = vadd.f32 %v221, %v237
        %v246 = vadd.f32 %v222, %v238
        %v247 = vadd.f32 %v223, %v239
        %v248 = vmax.f32 %v224, %v232
        %v249 = vmax.f32 %v225, %v233
        %v250 = vmax.f32 %v226, %v234
        %v251 = vmax.f32 %v227, %v235
        %v252 = vmax.f32 %v228, %v236
        %v253 = vmax.f32 %v229, %v237
        %v254 = vmax.f32 %v230, %v238
        %v255 = vmax.f32 %v231, %v239
        %s256 = scalar_lea.vmem %s194, 8
        %v257 = vld [vmem:[%s256] sm:$0xff]
        %v258 = vld [vmem:[%s256 + $0x10] sm:$0xff]
        %v259 = vld [vmem:[%s256 + $0x20] sm:$0xff]
        %v260 = vld [vmem:[%s256 + $0x30] sm:$0xff]
        %v261 = vld [vmem:[%s256 + $0x40] sm:$0xff]
        %v262 = vld [vmem:[%s256 + $0x50] sm:$0xff]
        %v263 = vld [vmem:[%s256 + $0x60] sm:$0xff]
        %v264 = vld [vmem:[%s256 + $0x70] sm:$0xff]
        %v265 = vadd.f32 %v240, %v257
        %v266 = vadd.f32 %v241, %v258
        %v267 = vadd.f32 %v242, %v259
        %v268 = vadd.f32 %v243, %v260
        %v269 = vadd.f32 %v244, %v261
        %v270 = vadd.f32 %v245, %v262
        %v271 = vadd.f32 %v246, %v263
        %v272 = vadd.f32 %v247, %v264
        %v273 = vmax.f32 %v248, %v257
        %v274 = vmax.f32 %v249, %v258
        %v275 = vmax.f32 %v250, %v259
        %v276 = vmax.f32 %v251, %v260
        %v277 = vmax.f32 %v252, %v261
        %v278 = vmax.f32 %v253, %v262
        %v279 = vmax.f32 %v254, %v263
        %v280 = vmax.f32 %v255, %v264
        %281 = vst [vmem:[#allocation2] sm:$0xff] %v265
        %282 = vst [vmem:[#allocation2 + $0x8] sm:$0xff] %v266
        %283 = vst [vmem:[#allocation2 + $0x10] sm:$0xff] %v267
        %284 = vst [vmem:[#allocation2 + $0x18] sm:$0xff] %v268
        %285 = vst [vmem:[#allocation2 + $0x20] sm:$0xff] %v269
        %286 = vst [vmem:[#allocation2 + $0x28] sm:$0xff] %v270
        %287 = vst [vmem:[#allocation2 + $0x30] sm:$0xff] %v271
        %288 = vst [vmem:[#allocation2 + $0x38] sm:$0xff] %v272
        %289 = vst [vmem:[#allocation3] sm:$0xff] %v273
        %290 = vst [vmem:[#allocation3 + $0x8] sm:$0xff] %v274
        %291 = vst [vmem:[#allocation3 + $0x10] sm:$0xff] %v275
        %292 = vst [vmem:[#allocation3 + $0x18] sm:$0xff] %v276
        %293 = vst [vmem:[#allocation3 + $0x20] sm:$0xff] %v277
        %294 = vst [vmem:[#allocation3 + $0x28] sm:$0xff] %v278
        %295 = vst [vmem:[#allocation3 + $0x30] sm:$0xff] %v279
        %296 = vst [vmem:[#allocation3 + $0x38] sm:$0xff] %v280
        // Predicated region
        $region37: #{channel_attention.1} parent=31 // pred_check
          %p297 = pneg %p196
        $region38: #{channel_attention.1} parent=31 // pred_check_branch
          %299 = sbr.rel (%p297) target = $region40
        $region39: #{channel_attention.1} parent=31 // pred_region
          %v300 = vld [vmem:[#allocation2] sm:$0xff]
          %v301 = vld [vmem:[#allocation2 + $0x8] sm:$0xff]
          %v302 = vld [vmem:[#allocation2 + $0x10] sm:$0xff]
          %v303 = vld [vmem:[#allocation2 + $0x18] sm:$0xff]
          %v304 = vld [vmem:[#allocation2 + $0x20] sm:$0xff]
          %v305 = vld [vmem:[#allocation2 + $0x28] sm:$0xff]
          %v306 = vld [vmem:[#allocation2 + $0x30] sm:$0xff]
          %v307 = vld [vmem:[#allocation2 + $0x38] sm:$0xff]
          %308 = vadd.xlane.f32.xlu0 %v300
          %v309 = vpop.xlane.xlu0 %308
          %310 = vadd.xlane.f32.xlu0 %v301
          %v311 = vpop.xlane.xlu0 %310
          %312 = vadd.xlane.f32.xlu0 %v302
          %v313 = vpop.xlane.xlu0 %312
          %314 = vadd.xlane.f32.xlu0 %v303
          %v315 = vpop.xlane.xlu0 %314
          %316 = vadd.xlane.f32.xlu0 %v304
          %v317 = vpop.xlane.xlu0 %316
          %318 = vadd.xlane.f32.xlu0 %v305
          %v319 = vpop.xlane.xlu0 %318
          %320 = vadd.xlane.f32.xlu0 %v306
          %v321 = vpop.xlane.xlu0 %320
          %322 = vadd.xlane.f32.xlu0 %v307
          %v323 = vpop.xlane.xlu0 %322
          %v324 = vmul.f32 %v309, 0.00390625
          %v325 = vmul.f32 %v311, 0.00390625
          %v326 = vmul.f32 %v313, 0.00390625
          %v327 = vmul.f32 %v315, 0.00390625
          %v328 = vmul.f32 %v317, 0.00390625
          %v329 = vmul.f32 %v319, 0.00390625
          %v330 = vmul.f32 %v321, 0.00390625
          %v331 = vmul.f32 %v323, 0.00390625
          %v332 = vld [vmem:[#allocation3] sm:$0xff]
          %v333 = vld [vmem:[#allocation3 + $0x8] sm:$0xff]
          %v334 = vld [vmem:[#allocation3 + $0x10] sm:$0xff]
          %v335 = vld [vmem:[#allocation3 + $0x18] sm:$0xff]
          %v336 = vld [vmem:[#allocation3 + $0x20] sm:$0xff]
          %v337 = vld [vmem:[#allocation3 + $0x28] sm:$0xff]
          %v338 = vld [vmem:[#allocation3 + $0x30] sm:$0xff]
          %v339 = vld [vmem:[#allocation3 + $0x38] sm:$0xff]
          %340 = vmax.xlane.f32.xlu0 %v332
          %v341 = vpop.xlane.xlu0 %340
          %342 = vmax.xlane.f32.xlu0 %v333
          %v343 = vpop.xlane.xlu0 %342
          %344 = vmax.xlane.f32.xlu0 %v334
          %v345 = vpop.xlane.xlu0 %344
          %346 = vmax.xlane.f32.xlu0 %v335
          %v347 = vpop.xlane.xlu0 %346
          %348 = vmax.xlane.f32.xlu0 %v336
          %v349 = vpop.xlane.xlu0 %348
          %350 = vmax.xlane.f32.xlu0 %v337
          %v351 = vpop.xlane.xlu0 %350
          %352 = vmax.xlane.f32.xlu0 %v338
          %v353 = vpop.xlane.xlu0 %352
          %354 = vmax.xlane.f32.xlu0 %v339
          %v355 = vpop.xlane.xlu0 %354
          %v364 = vlaneseq
          %v365 = vand.u32 %v364, 127
          %v366 = vlaneseq
          %v367 = vshrl.u32 %v366, 7
          %v368 = vsub.s32 %v365, %v367
          %v369 = vrot.slane %v324, %v368
          %v370 = vadd.s32 %v365, 4294967288
          %v371 = vlaneseq
          %v372 = vshrl.u32 %v371, 7
          %v373 = vsub.s32 %v370, %v372
          %v374 = vrot.slane %v325, %v373
          %vm375 = vcmask 130112
          %v376 = vsel %vm375, %v374, %v369
          %v377 = vadd.s32 %v365, 4294967280
          %v378 = vlaneseq
          %v379 = vshrl.u32 %v378, 7
          %v380 = vsub.s32 %v377, %v379
          %v381 = vrot.slane %v326, %v380
          %vm382 = vcmask 195712
          %v383 = vsel %vm382, %v381, %v376
          %v384 = vadd.s32 %v365, 4294967272
          %v385 = vlaneseq
          %v386 = vshrl.u32 %v385, 7
          %v387 = vsub.s32 %v384, %v386
          %v388 = vrot.slane %v327, %v387
          %vm389 = vcmask 261312
          %v390 = vsel %vm389, %v388, %v383
          %v391 = vadd.s32 %v365, 4294967264
          %v392 = vlaneseq
          %v393 = vshrl.u32 %v392, 7
          %v394 = vsub.s32 %v391, %v393
          %v395 = vrot.slane %v328, %v394
          %vm396 = vcmask 326912
          %v397 = vsel %vm396, %v395, %v390
          %v398 = vadd.s32 %v365, 4294967256
          %v399 = vlaneseq
          %v400 = vshrl.u32 %v399, 7
          %v401 = vsub.s32 %v398, %v400
          %v402 = vrot.slane %v329, %v401
          %vm403 = vcmask 392512
          %v404 = vsel %vm403, %v402, %v397
          %v405 = vadd.s32 %v365, 4294967248
          %v406 = vlaneseq
          %v407 = vshrl.u32 %v406, 7
          %v408 = vsub.s32 %v405, %v407
          %v409 = vrot.slane %v330, %v408
          %vm410 = vcmask 458112
          %v411 = vsel %vm410, %v409, %v404
          %v412 = vadd.s32 %v365, 4294967240
          %v413 = vlaneseq
          %v414 = vshrl.u32 %v413, 7
          %v415 = vsub.s32 %v412, %v414
          %v416 = vrot.slane %v331, %v415
          %vm417 = vcmask 523712
          %v418 = vsel %vm417, %v416, %v411
          %v428 = vlaneseq
          %v429 = vshrl.u32 %v428, 7
          %v430 = vsub.s32 %v365, %v429
          %v431 = vrot.slane %v341, %v430
          %v432 = vlaneseq
          %v433 = vshrl.u32 %v432, 7
          %v434 = vsub.s32 %v370, %v433
          %v435 = vrot.slane %v343, %v434
          %v436 = vsel %vm375, %v435, %v431
          %v437 = vlaneseq
          %v438 = vshrl.u32 %v437, 7
          %v439 = vsub.s32 %v377, %v438
          %v440 = vrot.slane %v345, %v439
          %v441 = vsel %vm382, %v440, %v436
          %v442 = vlaneseq
          %v443 = vshrl.u32 %v442, 7
          %v444 = vsub.s32 %v384, %v443
          %v445 = vrot.slane %v347, %v444
          %v446 = vsel %vm389, %v445, %v441
          %v447 = vlaneseq
          %v448 = vshrl.u32 %v447, 7
          %v449 = vsub.s32 %v391, %v448
          %v450 = vrot.slane %v349, %v449
          %v451 = vsel %vm396, %v450, %v446
          %v452 = vlaneseq
          %v453 = vshrl.u32 %v452, 7
          %v454 = vsub.s32 %v398, %v453
          %v455 = vrot.slane %v351, %v454
          %v456 = vsel %vm403, %v455, %v451
          %v457 = vlaneseq
          %v458 = vshrl.u32 %v457, 7
          %v459 = vsub.s32 %v405, %v458
          %v460 = vrot.slane %v353, %v459
          %v461 = vsel %vm410, %v460, %v456
          %v462 = vlaneseq
          %v463 = vshrl.u32 %v462, 7
          %v464 = vsub.s32 %v412, %v463
          %v465 = vrot.slane %v355, %v464
          %v466 = vsel %vm417, %v465, %v461
          %vm468 = vcmask 1040384
          %v469 = vsel %vm468, %v418, %v466
          %v470 = vld [vmem:[%s1] sm:$0xff]
          %v471 = vld [vmem:[%s1 + $0x8] sm:$0xff]
          %v472 = vld [vmem:[%s1 + $0x10] sm:$0xff]
          %v473 = vld [vmem:[%s1 + $0x18] sm:$0xff]
          %v474 = vld [vmem:[%s1 + $0x20] sm:$0xff]
          %v475 = vld [vmem:[%s1 + $0x28] sm:$0xff]
          %v476 = vld [vmem:[%s1 + $0x30] sm:$0xff]
          %v477 = vld [vmem:[%s1 + $0x38] sm:$0xff]
          %vm478 = vcmask 523264
          %v480 = vsel %vm478, %v469, 0
          %482 = vmatprep.subr.mxu0 0.0
          %483 = vmatpush1.msra.mxu0 %v470
          %484 = vmatprep.subr.mxu0 0.0
          %485 = vmatpush1.msra.mxu0 %v471
          %486 = vmatprep.subr.mxu0 0.0
          %487 = vmatpush1.msra.mxu0 %v472
          %488 = vmatprep.subr.mxu0 0.0
          %489 = vmatpush1.msra.mxu0 %v473
          %490 = vmatprep.subr.mxu0 0.0
          %491 = vmatpush1.msra.mxu0 %v474
          %492 = vmatprep.subr.mxu0 0.0
          %493 = vmatpush1.msra.mxu0 %v475
          %494 = vmatprep.subr.mxu0 0.0
          %495 = vmatpush1.msra.mxu0 %v476
          %496 = vmatprep.subr.mxu0 0.0
          %497 = vmatpush1.msra.mxu0 %v477
          %498 = vmatprep.subr.mxu0 0.0
          %499 = vmatpush1.msra.mxu0 0.0
          %500 = vmatprep.subr.mxu0 0.0
          %501 = vmatpush1.msra.mxu0 0.0
          %502 = vmatprep.subr.mxu0 0.0
          %503 = vmatpush1.msra.mxu0 0.0
          %504 = vmatprep.subr.mxu0 0.0
          %505 = vmatpush1.msra.mxu0 0.0
          %506 = vmatprep.subr.mxu0 0.0
          %507 = vmatpush1.msra.mxu0 0.0
          %508 = vmatprep.subr.mxu0 0.0
          %509 = vmatpush1.msra.mxu0 0.0
          %510 = vmatprep.subr.mxu0 0.0
          %511 = vmatpush1.msra.mxu0 0.0
          %512 = vmatprep.subr.mxu0 0.0
          %513 = vmatpush1.msra.mxu0 0.0
          %514 = vmatprep.subr.mxu0 0.0
          %515 = vmatpush1.msra.mxu0 0.0
          %516 = vmatprep.subr.mxu0 0.0
          %517 = vmatpush1.msra.mxu0 0.0
          %518 = vmatprep.subr.mxu0 0.0
          %519 = vmatpush1.msra.mxu0 0.0
          %520 = vmatprep.subr.mxu0 0.0
          %521 = vmatpush1.msra.mxu0 0.0
          %522 = vmatprep.subr.mxu0 0.0
          %523 = vmatpush1.msra.mxu0 0.0
          %524 = vmatprep.subr.mxu0 0.0
          %525 = vmatpush1.msra.mxu0 0.0
          %526 = vmatprep.subr.mxu0 0.0
          %527 = vmatpush1.msra.mxu0 0.0
          %528 = vmatprep.subr.mxu0 0.0
          %529 = vmatpush1.msra.mxu0 0.0
          %530 = vmatprep.subr.mxu0 0.0
          %531 = vmatpush1.msra.mxu0 0.0
          %532 = vmatprep.subr.mxu0 0.0
          %533 = vmatpush1.msra.mxu0 0.0
          %534 = vmatprep.subr.mxu0 0.0
          %535 = vmatpush1.msra.mxu0 0.0
          %536 = vmatprep.subr.mxu0 0.0
          %537 = vmatpush1.msra.mxu0 0.0
          %538 = vmatprep.subr.mxu0 0.0
          %539 = vmatpush1.msra.mxu0 0.0
          %540 = vmatprep.subr.mxu0 0.0
          %541 = vmatpush1.msra.mxu0 0.0
          %542 = vmatprep.subr.mxu0 0.0
          %543 = vmatpush1.msra.mxu0 0.0
          %544 = vmatprep.subr.mxu0 0.0
          %545 = vmatpush1.msra.mxu0 0.0
          %546 = vmatprep.mubr.f32.mxu0 0.0
          %547 = vmatmul.mubr.f32.gmra.mrb[0].mxu0 %v480
          %v548 = vpop.f32.mrb[0].mxu0
          %v549 = vadd.f32 0.0, %v548
          %v550 = vpop.f32.mrb[0].mxu0
          %551 = vdwg.mxu0
          %v552 = vmax.f32 %v549, 0.0
          %v553 = vld [vmem:[%s2] sm:$0xf]
          %vm554 = vcmask 31744
          %v556 = vsel %vm554, %v552, 0
          %vm558 = vcmask 1043456
          %v560 = vsel %vm558, %v553, 0
          %562 = vmatprep.subr.mxu0 0.0
          %563 = vmatpush1.msra.mxu0 %v560
          %564 = vmatprep.subr.mxu0 0.0
          %565 = vmatpush1.msra.mxu0 0.0
          %566 = vmatprep.subr.mxu0 0.0
          %567 = vmatpush1.msra.mxu0 0.0
          %568 = vmatprep.subr.mxu0 0.0
          %569 = vmatpush1.msra.mxu0 0.0
          %570 = vmatprep.subr.mxu0 0.0
          %571 = vmatpush1.msra.mxu0 0.0
          %572 = vmatprep.subr.mxu0 0.0
          %573 = vmatpush1.msra.mxu0 0.0
          %574 = vmatprep.subr.mxu0 0.0
          %575 = vmatpush1.msra.mxu0 0.0
          %576 = vmatprep.subr.mxu0 0.0
          %577 = vmatpush1.msra.mxu0 0.0
          %578 = vmatprep.subr.mxu0 0.0
          %579 = vmatpush1.msra.mxu0 0.0
          %580 = vmatprep.subr.mxu0 0.0
          %581 = vmatpush1.msra.mxu0 0.0
          %582 = vmatprep.subr.mxu0 0.0
          %583 = vmatpush1.msra.mxu0 0.0
          %584 = vmatprep.subr.mxu0 0.0
          %585 = vmatpush1.msra.mxu0 0.0
          %586 = vmatprep.subr.mxu0 0.0
          %587 = vmatpush1.msra.mxu0 0.0
          %588 = vmatprep.subr.mxu0 0.0
          %589 = vmatpush1.msra.mxu0 0.0
          %590 = vmatprep.subr.mxu0 0.0
          %591 = vmatpush1.msra.mxu0 0.0
          %592 = vmatprep.subr.mxu0 0.0
          %593 = vmatpush1.msra.mxu0 0.0
          %594 = vmatprep.subr.mxu0 0.0
          %595 = vmatpush1.msra.mxu0 0.0
          %596 = vmatprep.subr.mxu0 0.0
          %597 = vmatpush1.msra.mxu0 0.0
          %598 = vmatprep.subr.mxu0 0.0
          %599 = vmatpush1.msra.mxu0 0.0
          %600 = vmatprep.subr.mxu0 0.0
          %601 = vmatpush1.msra.mxu0 0.0
          %602 = vmatprep.subr.mxu0 0.0
          %603 = vmatpush1.msra.mxu0 0.0
          %604 = vmatprep.subr.mxu0 0.0
          %605 = vmatpush1.msra.mxu0 0.0
          %606 = vmatprep.subr.mxu0 0.0
          %607 = vmatpush1.msra.mxu0 0.0
          %608 = vmatprep.subr.mxu0 0.0
          %609 = vmatpush1.msra.mxu0 0.0
          %610 = vmatprep.subr.mxu0 0.0
          %611 = vmatpush1.msra.mxu0 0.0
          %612 = vmatprep.subr.mxu0 0.0
          %613 = vmatpush1.msra.mxu0 0.0
          %614 = vmatprep.subr.mxu0 0.0
          %615 = vmatpush1.msra.mxu0 0.0
          %616 = vmatprep.subr.mxu0 0.0
          %617 = vmatpush1.msra.mxu0 0.0
          %618 = vmatprep.subr.mxu0 0.0
          %619 = vmatpush1.msra.mxu0 0.0
          %620 = vmatprep.subr.mxu0 0.0
          %621 = vmatpush1.msra.mxu0 0.0
          %622 = vmatprep.subr.mxu0 0.0
          %623 = vmatpush1.msra.mxu0 0.0
          %624 = vmatprep.subr.mxu0 0.0
          %625 = vmatpush1.msra.mxu0 0.0
          %626 = vmatprep.mubr.f32.mxu0 0.0
          %627 = vmatmul.mubr.f32.gmra.mrb[0].mxu0 %v556
          %v628 = vpop.f32.mrb[0].mxu0
          %v629 = vadd.f32 0.0, %v628
          %v630 = vpop.f32.mrb[0].mxu0
          %631 = vdwg.mxu0
          %v633 = vrot.slane %v629, 1
          %v635 = vadd.f32 %v629, %v633
          %v636 = vxor.u32 %v635, 2147483648
          %v637 = vmul.f32 %v636, 1.442695
          %v638 = vpow.pop %v637
          %v639 = vadd.f32 %v638, 1.0
          %v640 = vrcp.pop %v639
          %v641 = vmul.f32 1.0, %v640
          %vm642 = vcmask 516096
          %643 = vst.msk [vmem:[%s185] sm:$0x1] %vm642, %v641
        $region40: #{channel_attention.1} parent=31 // pred_fallthru
          _
        %s644 = sand.u32 %s107, 1
        %s645 = scalar_lea.sflag [#allocation5], %s644
        %s646 = sand.u32 %s107, 1
        %s647 = scalar_lea.vmem [#allocation4], %s646
        // Predicated region
        $region41: #{channel_attention.1} parent=31 // pred_check
          %p648 = pneg %p117
        $region42: #{channel_attention.1} parent=31 // pred_check_branch
          %650 = sbr.rel (%p648) target = $region44
        $region43: #{channel_attention.1} parent=31 // pred_region
          %s652 = ssub.s32 16, 16
          %653 = vsyncadd %s645, %s652
          %s654 = smul.addr %s21, 16
          %s655 = scalar_lea.hbm %s3, %s654
          %s657 = sshll.u32 %s647, 4
          %s658 = int_to_ptr.vmem [resolvable:$true] %s657
          %660 = dma.vmem_to_hbm [thread:$0]  %s658, 16, %s655, %s645
        $region44: #{channel_attention.1} parent=31 // pred_fallthru
          _
      $region32: #{channel_attention.1} parent=5 // pred_fallthru
        _
      %p661 = scmp.le.s32.totalorder 2, %s12
      // Predicated region
      $region45: #{channel_attention.1} parent=5 // pred_check
        %p662 = pneg %p661
      $region46: #{channel_attention.1} parent=5 // pred_check_branch
        %664 = sbr.rel (%p662) target = $region48
      $region47: #{channel_attention.1} parent=5 // pred_region
        %s665 = ssub.s32 %s12, 2
        // Predicated region
        $region49: #{channel_attention.1} parent=47 // pred_check
          %p666 = pneg %p123
        $region50: #{channel_attention.1} parent=47 // pred_check_branch
          %668 = sbr.rel (%p666) target = $region52
        $region51: #{channel_attention.1} parent=47 // pred_region
          %s669 = sand.u32 %s108, 1
          %s670 = scalar_lea.sflag [#allocation5], %s669
          %s671 = sand.u32 %s108, 1
          %s672 = scalar_lea.vmem [#allocation4], %s671
          %673 = dma.done %s670, 16
        $region52: #{channel_attention.1} parent=47 // pred_fallthru
          _
      $region48: #{channel_attention.1} parent=5 // pred_fallthru
        _
    $region6: #{channel_attention.1} parent=1 // loop_footer
      %s16 = sadd.s32 1, %s12
    $region7: #{channel_attention.1} parent=1 // loop_footer_branch
      %11 = sbr.rel target = $region3
    $region8: #{channel_attention.1} parent=1 // loop_exit
      _
    %674 = vsyncpa [#allocation5], 1
    %s675 = scalar_lea.sflag [#allocation5], 1
    %676 = vsyncpa %s675, 1

</llo_original>
